<compile_context>
chip_gen: v5e
topology: v5e:2x2
jax: 0.10.0
libtpu: 0.0.40
codegen_flags: <defaults>
</compile_context>

<pallas_src>
import functools

import jax
import jax.numpy as jnp
from jax.experimental import pallas as pl
from jax.experimental.pallas import tpu as pltpu

_LANE = 128
_MIB = 1024 * 1024


def _round_up(x, m):
    return ((x + m - 1) // m) * m


def _largest_aligned_divisor(total, target, align=_LANE):
    """Largest multiple of `align` that divides `total` and is <= max(target, align).

    `total` must itself be a multiple of `align` (so `align` always qualifies).
    """
    best = align
    c = align
    limit = min(total, max(target, align))
    while c <= limit:
        if total % c == 0:
            best = c
        c += align
    return best


@functools.lru_cache(maxsize=None)
def _vmem_capacity_bytes():
    try:
        return int(pltpu.get_tpu_info().vmem_capacity_bytes)
    except Exception:
        return 64 * _MIB  # conservative (v7x-sized) fallback


# --------------------------------------------------------------------------
# Kernels
# --------------------------------------------------------------------------
def _ffn_resident_kernel(x_ref, w1_ref, b1_ref, w2_ref, b2_ref, o_ref, *, tff):
    """Weights fully VMEM-resident (constant index_map -> DMA'd once).

    Statically-unrolled loop over d_ff chunks keeps the (tm, tff) intermediate
    bounded; static slices on the weight refs are zero-cost views.
    """
    d_ff_p = w1_ref.shape[1]
    x = x_ref[...]                                           # (tm, d_model_p) bf16
    acc = jnp.zeros((x.shape[0], w2_ref.shape[1]), jnp.float32)
    for start in range(0, d_ff_p, tff):
        sl = slice(start, min(start + tff, d_ff_p))          # static, lane-aligned
        h = jnp.dot(x, w1_ref[:, sl], preferred_element_type=jnp.float32)
        h = jnp.maximum(h + b1_ref[:, sl], 0.0)              # fused bias + ReLU
        acc = acc + jnp.dot(h.astype(w2_ref.dtype), w2_ref[sl, :],
                            preferred_element_type=jnp.float32)
    o_ref[...] = (acc + b2_ref[...]).astype(o_ref.dtype)


def _ffn_stream_kernel(x_ref, w1_ref, b1_ref, w2_ref, b2_ref, o_ref, acc_ref):
    """Weight chunks streamed along grid axis 1; f32 accumulator stays resident."""
    k = pl.program_id(1)

    @pl.when(k == 0)
    def _():
        acc_ref[...] = jnp.zeros_like(acc_ref)

    h = jnp.dot(x_ref[...], w1_ref[...], preferred_element_type=jnp.float32)
    h = jnp.maximum(h + b1_ref[...], 0.0)                    # fused bias + ReLU
    acc_ref[...] += jnp.dot(h.astype(w2_ref.dtype), w2_ref[...],
                            preferred_element_type=jnp.float32)

    @pl.when(k == pl.num_programs(1) - 1)
    def _():
        o_ref[...] = (acc_ref[...] + b2_ref[...]).astype(o_ref.dtype)


# --------------------------------------------------------------------------
# Parameter preparation (one-time; hoists weight pad/cast off the hot path)
# --------------------------------------------------------------------------
def prepare_params(w1, b1, w2, b2):
    """Pad weights/biases to lane multiples of 128 and cast: W -> bf16, b -> f32.

    Call once and reuse the result.  Weights are stored (in_features, out_features)
    so the kernel computes x @ W directly.
    """
    d_model, d_ff = w1.shape
    d_model_p = _round_up(d_model, _LANE)
    d_ff_p = _round_up(d_ff, _LANE)
    if (d_model_p, d_ff_p) != (d_model, d_ff):
        w1 = jnp.pad(w1, ((0, d_model_p - d_model), (0, d_ff_p - d_ff)))
        w2 = jnp.pad(w2, ((0, d_ff_p - d_ff), (0, d_model_p - d_model)))
    if d_ff_p != d_ff:
        b1 = jnp.pad(b1, (0, d_ff_p - d_ff))
    if d_model_p != d_model:
        b2 = jnp.pad(b2, (0, d_model_p - d_model))
    return (w1.astype(jnp.bfloat16),
            b1.reshape(1, d_ff_p).astype(jnp.float32),
            w2.astype(jnp.bfloat16),
            b2.reshape(1, d_model_p).astype(jnp.float32))


def _params_prepared(w1, b1, w2, b2):
    return (w1.ndim == 2 and w2.ndim == 2 and b1.ndim == 2 and b2.ndim == 2
            and w1.dtype == jnp.bfloat16 and w2.dtype == jnp.bfloat16
            and b1.dtype == jnp.float32 and b2.dtype == jnp.float32
            and w1.shape[0] % _LANE == 0 and w1.shape[1] % _LANE == 0)


# --------------------------------------------------------------------------
# Forward wrapper
# --------------------------------------------------------------------------
@jax.jit
def positionwise_ffn(x, w1, b1, w2, b2):
    """y = w_2(dropout(relu(w_1(x)))) with dropout == identity (eval). Returns (y, None).

    x: (batch, seq, d_model).  Weights may be raw f32 (d_model,d_ff)/(d_ff,d_model)
    with 1-D biases, or pre-processed via prepare_params() (preferred: avoids a
    per-call pad/cast of the weight matrices).
    """
    batch, seq, d_model = x.shape
    m = batch * seq
    out_dtype = x.dtype
    out_itemsize = jnp.dtype(out_dtype).itemsize

    if not _params_prepared(w1, b1, w2, b2):
        w1, b1, w2, b2 = prepare_params(w1, b1, w2, b2)
    d_model_p, d_ff_p = w1.shape

    # ---- hardware-derived budgets -----------------------------------------
    vmem_cap = _vmem_capacity_bytes()
    usable = vmem_cap - 6 * _MIB           # headroom for Mosaic internal scratch
    small_vmem = vmem_cap <= 96 * _MIB     # 64 MiB/TC chips (v7x) -> 2 TensorCores

    m_p = _round_up(m, _LANE)

    def fit_row_tile(target):
        tm_ = _largest_aligned_divisor(m_p, target)
        # On 2-TensorCore chips make sure the "parallel" rows axis has >= 2 tiles.
        if small_vmem and m_p >= 2 * _LANE and m_p // tm_ < 2:
            tm_ = _largest_aligned_divisor(m_p, max(_LANE, m_p // 2))
        return tm_

    # ---- path 1: weights fully VMEM-resident (streamed from HBM once) -----
    tm_res = fit_row_tile(512)
    tff_res = min(d_ff_p, 2048)            # bounds the (tm, tff) intermediate
    resident_need = (
        2 * 2 * d_model_p * d_ff_p * 2             # W1 + W2 bf16 (assume 2 bufs each)
        + 2 * 8 * (d_ff_p + d_model_p) * 4         # biases (sublane-padded, 2 bufs)
        + 3 * tm_res * d_model_p * 2               # x tiles (2 pipeline bufs + value)
        + 2 * tm_res * d_model_p * out_itemsize    # output tiles
        + tm_res * d_model_p * 4                   # f32 accumulator
        + tm_res * tff_res * 6                     # h intermediate (f32 + bf16 copy)
    )
    use_resident = resident_need <= usable

    if use_resident:
        tm = tm_res
        vmem_need = resident_need
        grid = (m_p // tm,)
        kernel = functools.partial(_ffn_resident_kernel, tff=tff_res)
        in_specs = [
            pl.BlockSpec((tm, d_model_p), lambda i: (i, 0)),
            pl.BlockSpec((d_model_p, d_ff_p), lambda i: (0, 0)),    # resident W1
            pl.BlockSpec((1, d_ff_p), lambda i: (0, 0)),
            pl.BlockSpec((d_ff_p, d_model_p), lambda i: (0, 0)),    # resident W2
            pl.BlockSpec((1, d_model_p), lambda i: (0, 0)),
        ]
        out_specs = pl.BlockSpec((tm, d_model_p), lambda i: (i, 0))
        scratch_shapes = []
        dim_sem = ("parallel",)
        weight_passes = 1
    else:
        # ---- path 2: stream weight chunks; amortize with a large row tile --
        tm = fit_row_tile(512 if small_vmem else 1024)
        tff = _largest_aligned_divisor(d_ff_p, 384 if small_vmem else 512)

        def stream_need(tm_, tff_, nbuf_):
            return (2 * tm_ * d_model_p * 2                 # x tiles (bf16)
                    + nbuf_ * d_model_p * tff_ * 2          # W1 chunks
                    + nbuf_ * tff_ * d_model_p * 2          # W2 chunks
                    + 2 * 8 * (tff_ + d_model_p) * 4        # bias blocks
                    + 2 * tm_ * d_model_p * out_itemsize    # output tiles
                    + tm_ * d_model_p * 4                   # f32 accumulator
                    + tm_ * tff_ * 6)                       # h intermediate

        nbuf = 3 if stream_need(tm, tff, 3) <= usable else 2   # deeper weight pipeline
        while stream_need(tm, tff, nbuf) > usable and tm > _LANE:
            tm = _largest_aligned_divisor(m_p, max(_LANE, tm // 2))
        while stream_need(tm, tff, nbuf) > usable and tff > _LANE:
            tff = _largest_aligned_divisor(d_ff_p, max(_LANE, tff // 2))
        vmem_need = stream_need(tm, tff, nbuf)

        grid = (m_p // tm, d_ff_p // tff)
        kernel = _ffn_stream_kernel
        if nbuf == 3:
            w1_spec = pl.BlockSpec((d_model_p, tff), lambda i, k: (0, k),
                                   pipeline_mode=pl.Buffered(3))
            w2_spec = pl.BlockSpec((tff, d_model_p), lambda i, k: (k, 0),
                                   pipeline_mode=pl.Buffered(3))
        else:
            w1_spec = pl.BlockSpec((d_model_p, tff), lambda i, k: (0, k))
            w2_spec = pl.BlockSpec((tff, d_model_p), lambda i, k: (k, 0))
        in_specs = [
            pl.BlockSpec((tm, d_model_p), lambda i, k: (i, 0)),
            w1_spec,
            pl.BlockSpec((1, tff), lambda i, k: (0, k)),
            w2_spec,
            pl.BlockSpec((1, d_model_p), lambda i, k: (0, 0)),
        ]
        out_specs = pl.BlockSpec((tm, d_model_p), lambda i, k: (i, 0))
        scratch_shapes = [pltpu.VMEM((tm, d_model_p), jnp.float32)]
        dim_sem = ("parallel", "arbitrary")
        weight_passes = m_p // tm

    # ---- pad + cast x (cast to bf16 first so the pad copy is half the bytes)
    xb = x.reshape(m, d_model).astype(jnp.bfloat16)
    if m_p != m or d_model_p != d_model:
        xb = jnp.pad(xb, ((0, m_p - m), (0, d_model_p - d_model)))

    # ---- scoped-VMEM limit: generous vs. the budget, never above physical --
    vmem_limit = int(min(vmem_cap - 4 * _MIB,
                         max(vmem_need + vmem_need // 4, 32 * _MIB)))

    weight_bytes = 2 * d_model_p * d_ff_p * 2 + (d_ff_p + d_model_p) * 4
    cost = pl.CostEstimate(
        flops=4 * m_p * d_model_p * d_ff_p,
        transcendentals=0,
        bytes_accessed=(m_p * d_model_p * (2 + out_itemsize)
                        + weight_passes * weight_bytes),
    )

    y2d = pl.pallas_call(
        kernel,
        out_shape=jax.ShapeDtypeStruct((m_p, d_model_p), out_dtype),
        grid_spec=pltpu.PrefetchScalarGridSpec(
            num_scalar_prefetch=0,
            grid=grid,
            in_specs=in_specs,
            out_specs=out_specs,
            scratch_shapes=scratch_shapes,
        ),
        compiler_params=pltpu.CompilerParams(
            dimension_semantics=dim_sem,
            vmem_limit_bytes=vmem_limit,
        ),
        cost_estimate=cost,
    )(xb, w1, b1, w2, b2)

    y = y2d[:m, :d_model].reshape(batch, seq, d_model)
    return y, None


# --------------------------------------------------------------------------
# Init + self-test
# --------------------------------------------------------------------------
def init_params(key, d_model, d_ff, dtype=jnp.float32):
    """Deterministic init mirroring nn.Linear (uniform +-1/sqrt(fan_in)).

    Weights are stored transposed relative to PyTorch (in_features, out_features)
    so the kernel can do x @ W directly.
    """
    k1, k2, k3, k4 = jax.random.split(key, 4)
    bound1 = 1.0 / (d_model ** 0.5)
    bound2 = 1.0 / (d_ff ** 0.5)
    w1 = jax.random.uniform(k1, (d_model, d_ff), dtype, -bound1, bound1)
    b1 = jax.random.uniform(k2, (d_ff,), dtype, -bound1, bound1)
    w2 = jax.random.uniform(k3, (d_ff, d_model), dtype, -bound2, bound2)
    b2 = jax.random.uniform(k4, (d_model,), dtype, -bound2, bound2)
    return w1, b1, w2, b2


if __name__ == "__main__":
    key = jax.random.PRNGKey(0)
    kx, kp = jax.random.split(key)

    batch, seq, d_model, d_ff = 2, 8, 32, 64
    x = jax.random.normal(kx, (batch, seq, d_model), dtype=jnp.float32)
    w1, b1, w2, b2 = init_params(kp, d_model, d_ff)

    # One-time weight pad + bf16 cast, hoisted off the per-call path.
    params = prepare_params(w1, b1, w2, b2)

    y, aux = positionwise_ffn(x, *params)
    y = jax.block_until_ready(y)
    assert aux is None
    assert y.shape == x.shape and y.dtype == x.dtype

    # Reference in plain f32 JAX (dropout = identity in eval mode).  The kernel
    # runs its matmuls in bf16 with f32 accumulation, so allow bf16-level slop.
    ref = jnp.maximum(x @ w1 + b1, 0.0) @ w2 + b2
    assert jnp.allclose(y, ref, atol=5e-2, rtol=5e-2), "mismatch vs reference"

    print("KERNEL_OK")
</pallas_src>

<mosaic_0001>
module attributes {stable_mosaic.version = 11 : i64} {
  func.func @_ffn_resident_kernel(%arg0: i32, %arg1: memref<128x128xbf16, #tpu.memory_space<vmem>>, %arg2: memref<128x128xbf16, #tpu.memory_space<vmem>>, %arg3: memref<1x128xf32, #tpu.memory_space<vmem>>, %arg4: memref<128x128xbf16, #tpu.memory_space<vmem>>, %arg5: memref<1x128xf32, #tpu.memory_space<vmem>>, %arg6: memref<128x128xf32, #tpu.memory_space<vmem>>) attributes {dimension_semantics = [#tpu.dimension_semantics<parallel>], iteration_bounds = array<i64: 1>, scalar_prefetch = 0 : i64, scratch_operands = 0 : i64, tpu.core_type = #tpu.core_type<tc>, window_params = [{transform_indices = @transform_0, window_bounds = array<i64: 128, 128>}, {pipeline_mode = #tpu.pipeline_mode<synchronous>, transform_indices = @transform_1, window_bounds = array<i64: 128, 128>}, {pipeline_mode = #tpu.pipeline_mode<synchronous>, transform_indices = @transform_2, window_bounds = array<i64: 1, 128>}, {pipeline_mode = #tpu.pipeline_mode<synchronous>, transform_indices = @transform_3, window_bounds = array<i64: 128, 128>}, {pipeline_mode = #tpu.pipeline_mode<synchronous>, transform_indices = @transform_4, window_bounds = array<i64: 1, 128>}, {transform_indices = @transform_5, window_bounds = array<i64: 128, 128>}]} {
    %c0 = arith.constant 0 : index
    %c0_0 = arith.constant 0 : index
    %0 = vector.load %arg1[%c0, %c0_0] : memref<128x128xbf16, #tpu.memory_space<vmem>>, vector<128x128xbf16>
    %cst = arith.constant 0.000000e+00 : f32
    %1 = vector.broadcast %cst : f32 to vector<128x128xf32>
    %c0_1 = arith.constant 0 : index
    %c0_2 = arith.constant 0 : index
    %2 = vector.load %arg2[%c0_1, %c0_2] : memref<128x128xbf16, #tpu.memory_space<vmem>>, vector<128x128xbf16>
    %cst_3 = arith.constant dense<0.000000e+00> : vector<128x128xf32>
    %3 = tpu.matmul %0, %2, %cst_3 {dimension_numbers = #tpu.dot_dimension_numbers<[1], [0], [0], [1], [0, 0, 1, 1], [], []>} : vector<128x128xbf16>, vector<128x128xbf16>, vector<128x128xf32> -> vector<128x128xf32>
    %c0_4 = arith.constant 0 : index
    %c0_5 = arith.constant 0 : index
    %4 = vector.load %arg3[%c0_4, %c0_5] : memref<1x128xf32, #tpu.memory_space<vmem>>, vector<1x128xf32>
    %5 = vector.broadcast %4 : vector<1x128xf32> to vector<128x128xf32>
    %6 = arith.addf %3, %5 : vector<128x128xf32>
    %cst_6 = arith.constant 0.000000e+00 : f32
    %7 = vector.broadcast %cst_6 : f32 to vector<128x128xf32>
    %8 = arith.maximumf %6, %7 : vector<128x128xf32>
    %9 = arith.truncf %8 : vector<128x128xf32> to vector<128x128xbf16>
    %c0_7 = arith.constant 0 : index
    %c0_8 = arith.constant 0 : index
    %10 = vector.load %arg4[%c0_7, %c0_8] : memref<128x128xbf16, #tpu.memory_space<vmem>>, vector<128x128xbf16>
    %cst_9 = arith.constant dense<0.000000e+00> : vector<128x128xf32>
    %11 = tpu.matmul %9, %10, %cst_9 {dimension_numbers = #tpu.dot_dimension_numbers<[1], [0], [0], [1], [0, 0, 1, 1], [], []>} : vector<128x128xbf16>, vector<128x128xbf16>, vector<128x128xf32> -> vector<128x128xf32>
    %12 = arith.addf %1, %11 : vector<128x128xf32>
    %c0_10 = arith.constant 0 : index
    %c0_11 = arith.constant 0 : index
    %13 = vector.load %arg5[%c0_10, %c0_11] : memref<1x128xf32, #tpu.memory_space<vmem>>, vector<1x128xf32>
    %14 = vector.broadcast %13 : vector<1x128xf32> to vector<128x128xf32>
    %15 = arith.addf %12, %14 : vector<128x128xf32>
    %c0_12 = arith.constant 0 : index
    %c0_13 = arith.constant 0 : index
    %16 = vector.load %arg6[%c0_12, %c0_13] : memref<128x128xf32, #tpu.memory_space<vmem>>, vector<128x128xf32>
    tpu.vector_store %arg6[%c0_12, %c0_13], %15 {strides = array<i32>} : memref<128x128xf32, #tpu.memory_space<vmem>>, vector<128x128xf32>,
    return
  }
  func.func @transform_0(%arg0: i32) -> (i32, i32) {
    %c0_i32 = arith.constant 0 : i32
    %c0_i32_0 = arith.constant 0 : i32
    return %arg0, %c0_i32 : i32, i32
  }
  func.func @transform_1(%arg0: i32) -> (i32, i32) {
    %c0_i32 = arith.constant 0 : i32
    %c0_i32_0 = arith.constant 0 : i32
    %c0_i32_1 = arith.constant 0 : i32
    return %c0_i32, %c0_i32_0 : i32, i32
  }
  func.func @transform_2(%arg0: i32) -> (i32, i32) {
    %c0_i32 = arith.constant 0 : i32
    %c0_i32_0 = arith.constant 0 : i32
    %c0_i32_1 = arith.constant 0 : i32
    return %c0_i32, %c0_i32_0 : i32, i32
  }
  func.func @transform_3(%arg0: i32) -> (i32, i32) {
    %c0_i32 = arith.constant 0 : i32
    %c0_i32_0 = arith.constant 0 : i32
    %c0_i32_1 = arith.constant 0 : i32
    return %c0_i32, %c0_i32_0 : i32, i32
  }
  func.func @transform_4(%arg0: i32) -> (i32, i32) {
    %c0_i32 = arith.constant 0 : i32
    %c0_i32_0 = arith.constant 0 : i32
    %c0_i32_1 = arith.constant 0 : i32
    return %c0_i32, %c0_i32_0 : i32, i32
  }
  func.func @transform_5(%arg0: i32) -> (i32, i32) {
    %c0_i32 = arith.constant 0 : i32
    %c0_i32_0 = arith.constant 0 : i32
    return %arg0, %c0_i32 : i32, i32
  }
}

</mosaic_0001>

<llo_original>
// kernel: positionwise_ffn.1
$region0: #{positionwise_ffn.1}
  #allocation0 [shape = 'u32[]', space=smem, size = 0x4, offset = 0x4, fixed_abs, tag = 'smem constant byte address 0x4 - core index']
  #allocation1 [shape = 'u32[72,128]{1,0:T(1,128)}', space=vmem, size = 0x9000, scoped, tag = 'internal scratch']
  %s0 = inlined_call_operand.vmem [shape: bf16[128,128], index: 0, kind: input, shape index: {}]
  %s1 = inlined_call_operand.vmem [shape: bf16[128,128], index: 1, kind: input, shape index: {}]
  %s2 = inlined_call_operand.vmem [shape: f32[1,128], index: 2, kind: input, shape index: {}]
  %s3 = inlined_call_operand.hbm [shape: bf16[128,128], index: 3, kind: input, shape index: {}]
  %s4 = inlined_call_operand.vmem [shape: f32[1,128], index: 4, kind: input, shape index: {}]
  %s5 = inlined_call_operand.vmem [shape: f32[128,128], index: 5, kind: output, shape index: {}]
  %s6 = sld [smem:[#allocation0]]
  $region34: #{positionwise_ffn.1} parent=0
    _
  %s8 = ssub.s32 1, %s6
  %s9 = scalar_select 0, %s8, %s6
  $region1: #{positionwise_ffn.1} parent=0
    #allocation2 [shape = 'u8[32768]{0}', space=vmem, size = 0x8000, scoped, tag = 'input window, operand 3, single buffered']
    #allocation3 [shape = 's32[1]{0}', space=sflag, size = 0x4, scoped, tag = 'scoped memory for positionwise_ffn.1']
    %10 = vsyncpa [#allocation3], 0
    // Predicated region
    $region2: #{positionwise_ffn.1} parent=1 // pred_check
      _
    $region3: #{positionwise_ffn.1} parent=1 // pred_check_branch
      %12 = sbr.rel (0) target = $region5
    $region4: #{positionwise_ffn.1} parent=1 // pred_region
      _
    $region5: #{positionwise_ffn.1} parent=1 // pred_fallthru
      _
    // Predicated region
    $region6: #{positionwise_ffn.1} parent=1 // pred_check
      _
    $region7: #{positionwise_ffn.1} parent=1 // pred_check_branch
      %14 = sbr.rel (0) target = $region9
    $region8: #{positionwise_ffn.1} parent=1 // pred_region
      _
    $region9: #{positionwise_ffn.1} parent=1 // pred_fallthru
      _
    // Predicated region
    $region10: #{positionwise_ffn.1} parent=1 // pred_check
      _
    $region11: #{positionwise_ffn.1} parent=1 // pred_check_branch
      %16 = sbr.rel (0) target = $region13
    $region12: #{positionwise_ffn.1} parent=1 // pred_region
      _
    $region13: #{positionwise_ffn.1} parent=1 // pred_fallthru
      _
    // Predicated region
    $region14: #{positionwise_ffn.1} parent=1 // pred_check
      _
    $region15: #{positionwise_ffn.1} parent=1 // pred_check_branch
      %18 = sbr.rel (0) target = $region17
    $region16: #{positionwise_ffn.1} parent=1 // pred_region
      %20 = vsyncadd [#allocation3], 0
      %s21 = sshll.u32 %s3, 4
      %s22 = int_to_ptr.hbm [resolvable:$true] %s21
      %s23 = sshll.u32 [#allocation2], 4
      %s24 = int_to_ptr.vmem [resolvable:$true] %s23
      %29 = dma.hbm_to_vmem [thread:$0]  %s22, 1024, %s24, [#allocation3], 64, 64, 4
    $region17: #{positionwise_ffn.1} parent=1 // pred_fallthru
      _
    // Predicated region
    $region18: #{positionwise_ffn.1} parent=1 // pred_check
      _
    $region19: #{positionwise_ffn.1} parent=1 // pred_check_branch
      %31 = sbr.rel (0) target = $region21
    $region20: #{positionwise_ffn.1} parent=1 // pred_region
      _
    $region21: #{positionwise_ffn.1} parent=1 // pred_fallthru
      _
    // Predicated region
    $region22: #{positionwise_ffn.1} parent=1 // pred_check
      _
    $region23: #{positionwise_ffn.1} parent=1 // pred_check_branch
      %33 = sbr.rel (0) target = $region25
    $region24: #{positionwise_ffn.1} parent=1 // pred_region
      %35 = dma.done [#allocation3], 1024
    $region25: #{positionwise_ffn.1} parent=1 // pred_fallthru
      _
    %v36 = vld [vmem:[%s0] sm:$0xf]
    %v37 = vld [vmem:[%s0 + $0x4] sm:$0xf]
    %v38 = vld [vmem:[%s0 + $0x8] sm:$0xf]
    %v39 = vld [vmem:[%s0 + $0xc] sm:$0xf]
    %v40 = vld [vmem:[%s0 + $0x10] sm:$0xf]
    %v41 = vld [vmem:[%s0 + $0x14] sm:$0xf]
    %v42 = vld [vmem:[%s0 + $0x18] sm:$0xf]
    %v43 = vld [vmem:[%s0 + $0x1c] sm:$0xf]
    %v44 = vld [vmem:[%s0 + $0x20] sm:$0xf]
    %v45 = vld [vmem:[%s0 + $0x24] sm:$0xf]
    %v46 = vld [vmem:[%s0 + $0x28] sm:$0xf]
    %v47 = vld [vmem:[%s0 + $0x2c] sm:$0xf]
    %v48 = vld [vmem:[%s0 + $0x30] sm:$0xf]
    %v49 = vld [vmem:[%s0 + $0x34] sm:$0xf]
    %v50 = vld [vmem:[%s0 + $0x38] sm:$0xf]
    %v51 = vld [vmem:[%s0 + $0x3c] sm:$0xf]
    %v52 = vld [vmem:[%s1] sm:$0xf]
    %v53 = vld [vmem:[%s1 + $0x4] sm:$0xf]
    %v54 = vld [vmem:[%s1 + $0x8] sm:$0xf]
    %v55 = vld [vmem:[%s1 + $0xc] sm:$0xf]
    %v56 = vld [vmem:[%s1 + $0x10] sm:$0xf]
    %v57 = vld [vmem:[%s1 + $0x14] sm:$0xf]
    %v58 = vld [vmem:[%s1 + $0x18] sm:$0xf]
    %v59 = vld [vmem:[%s1 + $0x1c] sm:$0xf]
    %v60 = vld [vmem:[%s1 + $0x20] sm:$0xf]
    %v61 = vld [vmem:[%s1 + $0x24] sm:$0xf]
    %v62 = vld [vmem:[%s1 + $0x28] sm:$0xf]
    %v63 = vld [vmem:[%s1 + $0x2c] sm:$0xf]
    %v64 = vld [vmem:[%s1 + $0x30] sm:$0xf]
    %v65 = vld [vmem:[%s1 + $0x34] sm:$0xf]
    %v66 = vld [vmem:[%s1 + $0x38] sm:$0xf]
    %v67 = vld [vmem:[%s1 + $0x3c] sm:$0xf]
    %v68 = vld [vmem:[%s2] sm:$0x1]
    %v70 = vperm.slane %v68, 0
    %v88 = vunpack.c.l.b16 %v36
    %v89 = vunpack.c.l.b16 %v37
    %v90 = vunpack.c.l.b16 %v38
    %v91 = vunpack.c.l.b16 %v39
    %v92 = vunpack.c.l.b16 %v40
    %v93 = vunpack.c.l.b16 %v41
    %v94 = vunpack.c.l.b16 %v42
    %v95 = vunpack.c.l.b16 %v43
    %v96 = vunpack.c.l.b16 %v44
    %v97 = vunpack.c.l.b16 %v45
    %v98 = vunpack.c.l.b16 %v46
    %v99 = vunpack.c.l.b16 %v47
    %v100 = vunpack.c.l.b16 %v48
    %v101 = vunpack.c.l.b16 %v49
    %v102 = vunpack.c.l.b16 %v50
    %v103 = vunpack.c.l.b16 %v51
    %v104 = vpack.c.b16 %v89, %v88
    %v105 = vpack.c.b16 %v91, %v90
    %v106 = vpack.c.b16 %v93, %v92
    %v107 = vpack.c.b16 %v95, %v94
    %v108 = vpack.c.b16 %v97, %v96
    %v109 = vpack.c.b16 %v99, %v98
    %v110 = vpack.c.b16 %v101, %v100
    %v111 = vpack.c.b16 %v103, %v102
    %v136 = vunpack.c.l.b16 %v52
    %v137 = vunpack.c.l.b16 %v53
    %v138 = vunpack.c.l.b16 %v54
    %v139 = vunpack.c.l.b16 %v55
    %v140 = vunpack.c.l.b16 %v56
    %v141 = vunpack.c.l.b16 %v57
    %v142 = vunpack.c.l.b16 %v58
    %v143 = vunpack.c.l.b16 %v59
    %v144 = vunpack.c.l.b16 %v60
    %v145 = vunpack.c.l.b16 %v61
    %v146 = vunpack.c.l.b16 %v62
    %v147 = vunpack.c.l.b16 %v63
    %v148 = vunpack.c.l.b16 %v64
    %v149 = vunpack.c.l.b16 %v65
    %v150 = vunpack.c.l.b16 %v66
    %v151 = vunpack.c.l.b16 %v67
    %v152 = vpack.c.b16 %v137, %v136
    %v153 = vpack.c.b16 %v139, %v138
    %v154 = vpack.c.b16 %v141, %v140
    %v155 = vpack.c.b16 %v143, %v142
    %v156 = vpack.c.b16 %v145, %v144
    %v157 = vpack.c.b16 %v147, %v146
    %v158 = vpack.c.b16 %v149, %v148
    %v159 = vpack.c.b16 %v151, %v150
    %168 = vmatpush.bf16.msra.mxu0 %v159
    %169 = vmatpush.bf16.msra.mxu0 %v158
    %170 = vmatpush.bf16.msra.mxu0 %v157
    %171 = vmatpush.bf16.msra.mxu0 %v156
    %172 = vmatpush.bf16.msra.mxu0 %v155
    %173 = vmatpush.bf16.msra.mxu0 %v154
    %174 = vmatpush.bf16.msra.mxu0 %v153
    %175 = vmatpush.bf16.msra.mxu0 %v152
    %176 = vmatmul.bf16.gmra.mxu0 %v104
    %v177 = vpop.f32.mrf.mxu0
    %v178 = vadd.f32 %v70, %v177
    %v179 = vpop.f32.mrf.mxu0
    %v180 = vadd.f32 %v70, %v179
    %181 = vmatmul.bf16.gmra.mxu0 %v105
    %v182 = vpop.f32.mrf.mxu0
    %v183 = vadd.f32 %v70, %v182
    %v184 = vpop.f32.mrf.mxu0
    %v185 = vadd.f32 %v70, %v184
    %186 = vmatmul.bf16.gmra.mxu0 %v106
    %v187 = vpop.f32.mrf.mxu0
    %v188 = vadd.f32 %v70, %v187
    %v189 = vpop.f32.mrf.mxu0
    %v190 = vadd.f32 %v70, %v189
    %191 = vmatmul.bf16.gmra.mxu0 %v107
    %v192 = vpop.f32.mrf.mxu0
    %v193 = vadd.f32 %v70, %v192
    %v194 = vpop.f32.mrf.mxu0
    %v195 = vadd.f32 %v70, %v194
    %196 = vmatmul.bf16.gmra.mxu0 %v108
    %v197 = vpop.f32.mrf.mxu0
    %v198 = vadd.f32 %v70, %v197
    %v199 = vpop.f32.mrf.mxu0
    %v200 = vadd.f32 %v70, %v199
    %201 = vmatmul.bf16.gmra.mxu0 %v109
    %v202 = vpop.f32.mrf.mxu0
    %v203 = vadd.f32 %v70, %v202
    %v204 = vpop.f32.mrf.mxu0
    %v205 = vadd.f32 %v70, %v204
    %206 = vmatmul.bf16.gmra.mxu0 %v110
    %v207 = vpop.f32.mrf.mxu0
    %v208 = vadd.f32 %v70, %v207
    %v209 = vpop.f32.mrf.mxu0
    %v210 = vadd.f32 %v70, %v209
    %211 = vmatmul.bf16.gmra.mxu0 %v111
    %v212 = vpop.f32.mrf.mxu0
    %v213 = vadd.f32 %v70, %v212
    %v214 = vpop.f32.mrf.mxu0
    %v215 = vadd.f32 %v70, %v214
    %216 = vdwg.mxu0
    %v217 = vmax.f32 %v178, 0.0
    %v218 = vmax.f32 %v180, 0.0
    %v219 = vmax.f32 %v183, 0.0
    %v220 = vmax.f32 %v185, 0.0
    %v221 = vmax.f32 %v188, 0.0
    %v222 = vmax.f32 %v190, 0.0
    %v223 = vmax.f32 %v193, 0.0
    %v224 = vmax.f32 %v195, 0.0
    %v225 = vmax.f32 %v198, 0.0
    %v226 = vmax.f32 %v200, 0.0
    %v227 = vmax.f32 %v203, 0.0
    %v228 = vmax.f32 %v205, 0.0
    %v229 = vmax.f32 %v208, 0.0
    %v230 = vmax.f32 %v210, 0.0
    %v231 = vmax.f32 %v213, 0.0
    %v232 = vmax.f32 %v215, 0.0
    %v233 = vpack.c.bf16 %v218, %v217
    %v234 = vpack.c.bf16 %v220, %v219
    %v235 = vpack.c.bf16 %v222, %v221
    %v236 = vpack.c.bf16 %v224, %v223
    %v237 = vpack.c.bf16 %v226, %v225
    %v238 = vpack.c.bf16 %v228, %v227
    %v239 = vpack.c.bf16 %v230, %v229
    %v240 = vpack.c.bf16 %v232, %v231
    %v241 = vld [vmem:[#allocation2] sm:$0xf]
    %v242 = vld [vmem:[#allocation2 + $0x4] sm:$0xf]
    %v243 = vld [vmem:[#allocation2 + $0x8] sm:$0xf]
    %v244 = vld [vmem:[#allocation2 + $0xc] sm:$0xf]
    %v245 = vld [vmem:[#allocation2 + $0x10] sm:$0xf]
    %v246 = vld [vmem:[#allocation2 + $0x14] sm:$0xf]
    %v247 = vld [vmem:[#allocation2 + $0x18] sm:$0xf]
    %v248 = vld [vmem:[#allocation2 + $0x1c] sm:$0xf]
    %v249 = vld [vmem:[#allocation2 + $0x20] sm:$0xf]
    %v250 = vld [vmem:[#allocation2 + $0x24] sm:$0xf]
    %v251 = vld [vmem:[#allocation2 + $0x28] sm:$0xf]
    %v252 = vld [vmem:[#allocation2 + $0x2c] sm:$0xf]
    %v253 = vld [vmem:[#allocation2 + $0x30] sm:$0xf]
    %v254 = vld [vmem:[#allocation2 + $0x34] sm:$0xf]
    %v255 = vld [vmem:[#allocation2 + $0x38] sm:$0xf]
    %v256 = vld [vmem:[#allocation2 + $0x3c] sm:$0xf]
    %v257 = vld [vmem:[%s4] sm:$0x1]
    %v259 = vperm.slane %v257, 0
    %v277 = vunpack.c.l.b16 %v241
    %v278 = vunpack.c.l.b16 %v242
    %v279 = vunpack.c.l.b16 %v243
    %v280 = vunpack.c.l.b16 %v244
    %v281 = vunpack.c.l.b16 %v245
    %v282 = vunpack.c.l.b16 %v246
    %v283 = vunpack.c.l.b16 %v247
    %v284 = vunpack.c.l.b16 %v248
    %v285 = vunpack.c.l.b16 %v249
    %v286 = vunpack.c.l.b16 %v250
    %v287 = vunpack.c.l.b16 %v251
    %v288 = vunpack.c.l.b16 %v252
    %v289 = vunpack.c.l.b16 %v253
    %v290 = vunpack.c.l.b16 %v254
    %v291 = vunpack.c.l.b16 %v255
    %v292 = vunpack.c.l.b16 %v256
    %v293 = vpack.c.b16 %v278, %v277
    %v294 = vpack.c.b16 %v280, %v279
    %v295 = vpack.c.b16 %v282, %v281
    %v296 = vpack.c.b16 %v284, %v283
    %v297 = vpack.c.b16 %v286, %v285
    %v298 = vpack.c.b16 %v288, %v287
    %v299 = vpack.c.b16 %v290, %v289
    %v300 = vpack.c.b16 %v292, %v291
    %309 = vmatpush.bf16.msra.mxu0 %v300
    %310 = vmatpush.bf16.msra.mxu0 %v299
    %311 = vmatpush.bf16.msra.mxu0 %v298
    %312 = vmatpush.bf16.msra.mxu0 %v297
    %313 = vmatpush.bf16.msra.mxu0 %v296
    %314 = vmatpush.bf16.msra.mxu0 %v295
    %315 = vmatpush.bf16.msra.mxu0 %v294
    %316 = vmatpush.bf16.msra.mxu0 %v293
    %317 = vmatmul.bf16.gmra.mxu0 %v233
    %v318 = vpop.f32.mrf.mxu0
    %v319 = vadd.f32 %v259, %v318
    %v320 = vpop.f32.mrf.mxu0
    %v321 = vadd.f32 %v259, %v320
    %322 = vmatmul.bf16.gmra.mxu0 %v234
    %v323 = vpop.f32.mrf.mxu0
    %v324 = vadd.f32 %v259, %v323
    %v325 = vpop.f32.mrf.mxu0
    %v326 = vadd.f32 %v259, %v325
    %327 = vmatmul.bf16.gmra.mxu0 %v235
    %v328 = vpop.f32.mrf.mxu0
    %v329 = vadd.f32 %v259, %v328
    %v330 = vpop.f32.mrf.mxu0
    %v331 = vadd.f32 %v259, %v330
    %332 = vmatmul.bf16.gmra.mxu0 %v236
    %v333 = vpop.f32.mrf.mxu0
    %v334 = vadd.f32 %v259, %v333
    %v335 = vpop.f32.mrf.mxu0
    %v336 = vadd.f32 %v259, %v335
    %337 = vmatmul.bf16.gmra.mxu0 %v237
    %v338 = vpop.f32.mrf.mxu0
    %v339 = vadd.f32 %v259, %v338
    %v340 = vpop.f32.mrf.mxu0
    %v341 = vadd.f32 %v259, %v340
    %342 = vmatmul.bf16.gmra.mxu0 %v238
    %v343 = vpop.f32.mrf.mxu0
    %v344 = vadd.f32 %v259, %v343
    %v345 = vpop.f32.mrf.mxu0
    %v346 = vadd.f32 %v259, %v345
    %347 = vmatmul.bf16.gmra.mxu0 %v239
    %v348 = vpop.f32.mrf.mxu0
    %v349 = vadd.f32 %v259, %v348
    %v350 = vpop.f32.mrf.mxu0
    %v351 = vadd.f32 %v259, %v350
    %352 = vmatmul.bf16.gmra.mxu0 %v240
    %v353 = vpop.f32.mrf.mxu0
    %v354 = vadd.f32 %v259, %v353
    %v355 = vpop.f32.mrf.mxu0
    %v356 = vadd.f32 %v259, %v355
    %357 = vdwg.mxu0
    %358 = vst [vmem:[%s5] sm:$0xff] %v319
    %359 = vst [vmem:[%s5 + $0x8] sm:$0xff] %v321
    %360 = vst [vmem:[%s5 + $0x10] sm:$0xff] %v324
    %361 = vst [vmem:[%s5 + $0x18] sm:$0xff] %v326
    %362 = vst [vmem:[%s5 + $0x20] sm:$0xff] %v329
    %363 = vst [vmem:[%s5 + $0x28] sm:$0xff] %v331
    %364 = vst [vmem:[%s5 + $0x30] sm:$0xff] %v334
    %365 = vst [vmem:[%s5 + $0x38] sm:$0xff] %v336
    %366 = vst [vmem:[%s5 + $0x40] sm:$0xff] %v339
    %367 = vst [vmem:[%s5 + $0x48] sm:$0xff] %v341
    %368 = vst [vmem:[%s5 + $0x50] sm:$0xff] %v344
    %369 = vst [vmem:[%s5 + $0x58] sm:$0xff] %v346
    %370 = vst [vmem:[%s5 + $0x60] sm:$0xff] %v349
    %371 = vst [vmem:[%s5 + $0x68] sm:$0xff] %v351
    %372 = vst [vmem:[%s5 + $0x70] sm:$0xff] %v354
    %373 = vst [vmem:[%s5 + $0x78] sm:$0xff] %v356
    // Predicated region
    $region26: #{positionwise_ffn.1} parent=1 // pred_check
      _
    $region27: #{positionwise_ffn.1} parent=1 // pred_check_branch
      %375 = sbr.rel (0) target = $region29
    $region28: #{positionwise_ffn.1} parent=1 // pred_region
      _
    $region29: #{positionwise_ffn.1} parent=1 // pred_fallthru
      _
    // Predicated region
    $region30: #{positionwise_ffn.1} parent=1 // pred_check
      _
    $region31: #{positionwise_ffn.1} parent=1 // pred_check_branch
      %377 = sbr.rel (0) target = $region33
    $region32: #{positionwise_ffn.1} parent=1 // pred_region
      _
    $region33: #{positionwise_ffn.1} parent=1 // pred_fallthru
      _
    %378 = vsyncpa [#allocation3], 1

</llo_original>
